<compile_context>
chip_gen: v7x
topology: tpu7x:2x2x1
jax: 0.10.0
libtpu: 0.0.40
codegen_flags: <defaults>
</compile_context>

<pallas_src>
import jax
import jax.numpy as jnp
from jax import lax
from jax.experimental import pallas as pl
from jax.experimental.pallas import tpu as pltpu

C, H, W = 3, 32, 32
IN_FEATURES = C * H * W          # 3072 (multiple of 128 -> lane-dense K)
LATENT = 2                       # true output features of the encoder
LATENT_PAD = 8                   # sublane-padded output feature dim


def _round_up(x, m):
    return -(-x // m) * m


# ----------------------------------------------------------------------------
# Kernel: one batch tile, full-K trans_b matmul + bias + tanh, stored directly.
# ----------------------------------------------------------------------------
def _encoder_kernel(x_ref, wt_ref, b_ref, o_ref):
    # x: (tb, K) f32 -> bf16 for the MXU; wt: (8, K) bf16; contract last dims.
    x = x_ref[...].astype(jnp.bfloat16)
    y = lax.dot_general(
        x, wt_ref[...],
        dimension_numbers=(((1,), (1,)), ((), ())),
        preferred_element_type=jnp.float32)          # (tb, 8) f32 accumulation
    o_ref[...] = jnp.tanh(y + b_ref[...])


def encoder_linear_tanh(x2d, w_t, b):
    """y = tanh(x2d @ w_t.T + b).

    x2d: (Bp, 3072) f32, Bp a multiple of 8.
    w_t: (8, 3072) bf16 (rows >= LATENT are zero).
    b:   (1, 8) f32 (cols >= LATENT are zero).
    """
    Bp, K = x2d.shape
    Npad = w_t.shape[0]
    assert Bp % 8 == 0 and K % 128 == 0

    tb = min(512, Bp)                 # 512-row tiles for large B; full batch if small
    grid = (pl.cdiv(Bp, tb),)         # ragged last block is fine (rows discarded)

    return pl.pallas_call(
        _encoder_kernel,
        out_shape=jax.ShapeDtypeStruct((Bp, Npad), jnp.float32),
        grid_spec=pltpu.PrefetchScalarGridSpec(
            num_scalar_prefetch=0,
            grid=grid,
            in_specs=[
                pl.BlockSpec((tb, K), lambda i: (i, 0)),     # activation tile
                pl.BlockSpec((Npad, K), lambda i: (0, 0)),   # tiny weight, resident
                pl.BlockSpec((1, Npad), lambda i: (0, 0)),   # bias, resident
            ],
            out_specs=pl.BlockSpec((tb, Npad), lambda i: (i, 0)),
        ),
        compiler_params=pltpu.CompilerParams(
            dimension_semantics=("parallel",),               # shard batch across TCs
            vmem_limit_bytes=32 * 1024 * 1024,               # headroom for tb=512 on v5e
        ),
    )(x2d, w_t, b)


# ----------------------------------------------------------------------------
# Parameter init (mimics PyTorch nn.Linear(3072, 2): U(-1/sqrt(fan_in), +)).
# Weight is stored transposed, sublane-padded 2 -> 8, and cast to bf16 ONCE here.
# ----------------------------------------------------------------------------
def init_params(key):
    kw, kb = jax.random.split(key)
    bound = 1.0 / float(IN_FEATURES) ** 0.5
    w = jax.random.uniform(kw, (IN_FEATURES, LATENT), jnp.float32, -bound, bound)
    b = jax.random.uniform(kb, (LATENT,), jnp.float32, -bound, bound)
    w_t = jnp.zeros((LATENT_PAD, IN_FEATURES), jnp.float32).at[:LATENT, :].set(w.T)
    w_t = w_t.astype(jnp.bfloat16)
    b_p = jnp.zeros((1, LATENT_PAD), jnp.float32).at[0, :LATENT].set(b)
    return w_t, b_p


# ----------------------------------------------------------------------------
# Full forward pass: Flatten -> Linear -> Tanh  (single fused Pallas call)
# ----------------------------------------------------------------------------
@jax.jit
def cifar10_encoder1_forward(x, params):
    w_t, b = params
    B = x.shape[0]
    xf = x.reshape(B, -1).astype(jnp.float32)       # nn.Flatten (free for f32 input)
    Bp = _round_up(B, 8)                            # sublane-align batch only
    if Bp != B:
        xf = jnp.pad(xf, ((0, Bp - B), (0, 0)))     # tiny (<8 rows) when needed
    y = encoder_linear_tanh(xf, w_t, b)
    return y[:B, :LATENT]                           # drop batch + feature padding


if __name__ == "__main__":
    key = jax.random.PRNGKey(0)
    kp, kx = jax.random.split(key)
    params = init_params(kp)
    x = jax.random.normal(kx, (2, C, H, W), dtype=jnp.float32)

    out = cifar10_encoder1_forward(x, params)
    jax.block_until_ready(out)

    assert out.shape == (2, LATENT), out.shape
    assert out.dtype == jnp.float32

    # Pure-JAX reference (bf16-rounded operands, matching the kernel's MXU inputs).
    w_t, b_p = params
    w_f32 = w_t.astype(jnp.float32)[:LATENT, :].T                       # (3072, 2)
    x_bf = x.reshape(2, -1).astype(jnp.bfloat16).astype(jnp.float32)    # (2, 3072)
    ref = jnp.tanh(x_bf @ w_f32 + b_p[0, :LATENT])
    assert jnp.allclose(out, ref, atol=1e-2, rtol=1e-2), (out, ref)

    print("KERNEL_OK")
</pallas_src>

<mosaic_0001>
module attributes {stable_mosaic.version = 11 : i64} {
  func.func @_encoder_kernel(%arg0: i32, %arg1: memref<8x3072xf32, #tpu.memory_space<vmem>>, %arg2: memref<8x3072xbf16, #tpu.memory_space<vmem>>, %arg3: memref<1x8xf32, #tpu.memory_space<vmem>>, %arg4: memref<8x8xf32, #tpu.memory_space<vmem>>) attributes {dimension_semantics = [#tpu.dimension_semantics<parallel>], iteration_bounds = array<i64: 1>, scalar_prefetch = 0 : i64, scratch_operands = 0 : i64, tpu.core_type = #tpu.core_type<tc>, window_params = [{transform_indices = @transform_0, window_bounds = array<i64: 8, 3072>}, {pipeline_mode = #tpu.pipeline_mode<synchronous>, transform_indices = @transform_1, window_bounds = array<i64: 8, 3072>}, {pipeline_mode = #tpu.pipeline_mode<synchronous>, transform_indices = @transform_2, window_bounds = array<i64: 1, 8>}, {transform_indices = @transform_3, window_bounds = array<i64: 8, 8>}]} {
    %c0 = arith.constant 0 : index
    %c0_0 = arith.constant 0 : index
    %0 = vector.load %arg1[%c0, %c0_0] : memref<8x3072xf32, #tpu.memory_space<vmem>>, vector<8x3072xf32>
    %1 = arith.truncf %0 : vector<8x3072xf32> to vector<8x3072xbf16>
    %c0_1 = arith.constant 0 : index
    %c0_2 = arith.constant 0 : index
    %2 = vector.load %arg2[%c0_1, %c0_2] : memref<8x3072xbf16, #tpu.memory_space<vmem>>, vector<8x3072xbf16>
    %cst = arith.constant dense<0.000000e+00> : vector<8x8xf32>
    %3 = tpu.matmul %1, %2, %cst {dimension_numbers = #tpu.dot_dimension_numbers<[1], [1], [0], [0], [0, 0, 1, 0], [], []>} : vector<8x3072xbf16>, vector<8x3072xbf16>, vector<8x8xf32> -> vector<8x8xf32>
    %c0_3 = arith.constant 0 : index
    %c0_4 = arith.constant 0 : index
    %4 = vector.load %arg3[%c0_3, %c0_4] : memref<1x8xf32, #tpu.memory_space<vmem>>, vector<1x8xf32>
    %5 = vector.broadcast %4 : vector<1x8xf32> to vector<8x8xf32>
    %6 = arith.addf %3, %5 : vector<8x8xf32>
    %7 = math.tanh %6 : vector<8x8xf32>
    %c0_5 = arith.constant 0 : index
    %c0_6 = arith.constant 0 : index
    %8 = vector.load %arg4[%c0_5, %c0_6] : memref<8x8xf32, #tpu.memory_space<vmem>>, vector<8x8xf32>
    tpu.vector_store %arg4[%c0_5, %c0_6], %7 {strides = array<i32>} : memref<8x8xf32, #tpu.memory_space<vmem>>, vector<8x8xf32>,
    return
  }
  func.func @transform_0(%arg0: i32) -> (i32, i32) {
    %c0_i32 = arith.constant 0 : i32
    %c0_i32_0 = arith.constant 0 : i32
    return %arg0, %c0_i32 : i32, i32
  }
  func.func @transform_1(%arg0: i32) -> (i32, i32) {
    %c0_i32 = arith.constant 0 : i32
    %c0_i32_0 = arith.constant 0 : i32
    %c0_i32_1 = arith.constant 0 : i32
    return %c0_i32, %c0_i32_0 : i32, i32
  }
  func.func @transform_2(%arg0: i32) -> (i32, i32) {
    %c0_i32 = arith.constant 0 : i32
    %c0_i32_0 = arith.constant 0 : i32
    %c0_i32_1 = arith.constant 0 : i32
    return %c0_i32, %c0_i32_0 : i32, i32
  }
  func.func @transform_3(%arg0: i32) -> (i32, i32) {
    %c0_i32 = arith.constant 0 : i32
    %c0_i32_0 = arith.constant 0 : i32
    return %arg0, %c0_i32 : i32, i32
  }
}

</mosaic_0001>

<llo_original>
// kernel: cifar10_encoder1_forward.1
$region0: #{cifar10_encoder1_forward.1}
  #allocation0 [shape = 'u32[]', space=smem, size = 0x4, offset = 0x4, fixed_abs, tag = 'smem constant byte address 0x4 - core index']
  #allocation1 [shape = 'u32[144,128]{1,0:T(1,128)}', space=vmem, size = 0x12000, scoped, tag = 'internal scratch']
  %s0 = inlined_call_operand.vmem [shape: f32[8,3072], index: 0, kind: input, shape index: {}]
  %s1 = inlined_call_operand.vmem [shape: bf16[8,3072], index: 1, kind: input, shape index: {}]
  %s2 = inlined_call_operand.vmem [shape: f32[1,8], index: 2, kind: input, shape index: {}]
  %s3 = inlined_call_operand.vmem [shape: f32[8,8], index: 3, kind: output, shape index: {}]
  %s4 = sld [smem:[#allocation0]]
  $region22: #{cifar10_encoder1_forward.1} parent=0
    _
  %s6 = ssub.s32 1, %s4
  %s7 = scalar_select 0, %s6, %s4
  // Predicated region
  $region2: #{cifar10_encoder1_forward.1} parent=0 // pred_check
    _
  $region3: #{cifar10_encoder1_forward.1} parent=0 // pred_check_branch
    %9 = sbr.rel (0) target = $region5
  $region4: #{cifar10_encoder1_forward.1} parent=0 // pred_region
    _
  $region5: #{cifar10_encoder1_forward.1} parent=0 // pred_fallthru
    _
  // Predicated region
  $region6: #{cifar10_encoder1_forward.1} parent=0 // pred_check
    _
  $region7: #{cifar10_encoder1_forward.1} parent=0 // pred_check_branch
    %11 = sbr.rel (0) target = $region9
  $region8: #{cifar10_encoder1_forward.1} parent=0 // pred_region
    _
  $region9: #{cifar10_encoder1_forward.1} parent=0 // pred_fallthru
    _
  // Predicated region
  $region10: #{cifar10_encoder1_forward.1} parent=0 // pred_check
    _
  $region11: #{cifar10_encoder1_forward.1} parent=0 // pred_check_branch
    %13 = sbr.rel (0) target = $region13
  $region12: #{cifar10_encoder1_forward.1} parent=0 // pred_region
    _
  $region13: #{cifar10_encoder1_forward.1} parent=0 // pred_fallthru
    _
  %v15 = vld [vmem:[%s0] sm:$0xff]
  %v16 = vld [vmem:[%s0 + $0x8] sm:$0xff]
  %v17 = vld [vmem:[%s0 + $0x10] sm:$0xff]
  %v18 = vld [vmem:[%s0 + $0x18] sm:$0xff]
  %v19 = vld [vmem:[%s0 + $0x20] sm:$0xff]
  %v20 = vld [vmem:[%s0 + $0x28] sm:$0xff]
  %v21 = vld [vmem:[%s0 + $0x30] sm:$0xff]
  %v22 = vld [vmem:[%s0 + $0x38] sm:$0xff]
  %v23 = vld [vmem:[%s0 + $0x40] sm:$0xff]
  %v24 = vld [vmem:[%s0 + $0x48] sm:$0xff]
  %v25 = vld [vmem:[%s0 + $0x50] sm:$0xff]
  %v26 = vld [vmem:[%s0 + $0x58] sm:$0xff]
  %v27 = vld [vmem:[%s0 + $0x60] sm:$0xff]
  %v28 = vld [vmem:[%s0 + $0x68] sm:$0xff]
  %v29 = vld [vmem:[%s0 + $0x70] sm:$0xff]
  %v30 = vld [vmem:[%s0 + $0x78] sm:$0xff]
  %v31 = vld [vmem:[%s0 + $0x80] sm:$0xff]
  %v32 = vld [vmem:[%s0 + $0x88] sm:$0xff]
  %v33 = vld [vmem:[%s0 + $0x90] sm:$0xff]
  %v34 = vld [vmem:[%s0 + $0x98] sm:$0xff]
  %v35 = vld [vmem:[%s0 + $0xa0] sm:$0xff]
  %v36 = vld [vmem:[%s0 + $0xa8] sm:$0xff]
  %v37 = vld [vmem:[%s0 + $0xb0] sm:$0xff]
  %v38 = vld [vmem:[%s0 + $0xb8] sm:$0xff]
  %v39 = vpack.c.bf16 %v15, %v15
  %v40 = vpack.c.bf16 %v16, %v16
  %v41 = vpack.c.bf16 %v17, %v17
  %v42 = vpack.c.bf16 %v18, %v18
  %v43 = vpack.c.bf16 %v19, %v19
  %v44 = vpack.c.bf16 %v20, %v20
  %v45 = vpack.c.bf16 %v21, %v21
  %v46 = vpack.c.bf16 %v22, %v22
  %v47 = vpack.c.bf16 %v23, %v23
  %v48 = vpack.c.bf16 %v24, %v24
  %v49 = vpack.c.bf16 %v25, %v25
  %v50 = vpack.c.bf16 %v26, %v26
  %v51 = vpack.c.bf16 %v27, %v27
  %v52 = vpack.c.bf16 %v28, %v28
  %v53 = vpack.c.bf16 %v29, %v29
  %v54 = vpack.c.bf16 %v30, %v30
  %v55 = vpack.c.bf16 %v31, %v31
  %v56 = vpack.c.bf16 %v32, %v32
  %v57 = vpack.c.bf16 %v33, %v33
  %v58 = vpack.c.bf16 %v34, %v34
  %v59 = vpack.c.bf16 %v35, %v35
  %v60 = vpack.c.bf16 %v36, %v36
  %v61 = vpack.c.bf16 %v37, %v37
  %v62 = vpack.c.bf16 %v38, %v38
  %v63 = vld [vmem:[%s1] sm:$0xff]
  %v64 = vld [vmem:[%s1 + $0x8] sm:$0xff]
  %v65 = vld [vmem:[%s1 + $0x10] sm:$0xff]
  %v66 = vld [vmem:[%s1 + $0x18] sm:$0xff]
  %v67 = vld [vmem:[%s1 + $0x20] sm:$0xff]
  %v68 = vld [vmem:[%s1 + $0x28] sm:$0xff]
  %v69 = vld [vmem:[%s1 + $0x30] sm:$0xff]
  %v70 = vld [vmem:[%s1 + $0x38] sm:$0xff]
  %v71 = vld [vmem:[%s1 + $0x40] sm:$0xff]
  %v72 = vld [vmem:[%s1 + $0x48] sm:$0xff]
  %v73 = vld [vmem:[%s1 + $0x50] sm:$0xff]
  %v74 = vld [vmem:[%s1 + $0x58] sm:$0xff]
  %v75 = vld [vmem:[%s2] sm:$0x1]
  %v77 = vlaneseq
  %v78 = vshrl.u32 %v77, 7
  %v79 = vsub.s32 0, %v78
  %v80 = vrot.slane %v75, %v79
  %v94 = vunpack.c.l.b16 %v63
  %v95 = vunpack.c.h.b16 %v63
  %v96 = vunpack.c.l.b16 %v64
  %v97 = vunpack.c.h.b16 %v64
  %v98 = vunpack.c.l.b16 %v65
  %v99 = vunpack.c.h.b16 %v65
  %v100 = vunpack.c.l.b16 %v66
  %v101 = vunpack.c.h.b16 %v66
  %v102 = vunpack.c.l.b16 %v67
  %v103 = vunpack.c.h.b16 %v67
  %v104 = vunpack.c.l.b16 %v68
  %v105 = vunpack.c.h.b16 %v68
  %v106 = vunpack.c.l.b16 %v69
  %v107 = vunpack.c.h.b16 %v69
  %v108 = vunpack.c.l.b16 %v70
  %v109 = vunpack.c.h.b16 %v70
  %v110 = vunpack.c.l.b16 %v71
  %v111 = vunpack.c.h.b16 %v71
  %v112 = vunpack.c.l.b16 %v72
  %v113 = vunpack.c.h.b16 %v72
  %v114 = vunpack.c.l.b16 %v73
  %v115 = vunpack.c.h.b16 %v73
  %v116 = vunpack.c.l.b16 %v74
  %v117 = vunpack.c.h.b16 %v74
  %v118 = vpack.c.b16 %v94, %v94
  %v119 = vpack.c.b16 %v95, %v95
  %v120 = vpack.c.b16 %v96, %v96
  %v121 = vpack.c.b16 %v97, %v97
  %v122 = vpack.c.b16 %v98, %v98
  %v123 = vpack.c.b16 %v99, %v99
  %v124 = vpack.c.b16 %v100, %v100
  %v125 = vpack.c.b16 %v101, %v101
  %v126 = vpack.c.b16 %v102, %v102
  %v127 = vpack.c.b16 %v103, %v103
  %v128 = vpack.c.b16 %v104, %v104
  %v129 = vpack.c.b16 %v105, %v105
  %v130 = vpack.c.b16 %v106, %v106
  %v131 = vpack.c.b16 %v107, %v107
  %v132 = vpack.c.b16 %v108, %v108
  %v133 = vpack.c.b16 %v109, %v109
  %v134 = vpack.c.b16 %v110, %v110
  %v135 = vpack.c.b16 %v111, %v111
  %v136 = vpack.c.b16 %v112, %v112
  %v137 = vpack.c.b16 %v113, %v113
  %v138 = vpack.c.b16 %v114, %v114
  %v139 = vpack.c.b16 %v115, %v115
  %v140 = vpack.c.b16 %v116, %v116
  %v141 = vpack.c.b16 %v117, %v117
  %166 = vmatprep.subr.bf16.mxu0 %v119
  %167 = vmatpush1.bf16.xpose.msra.mxu0 %v118
  %168 = vmatprep.subr.bf16.mxu0 0
  %169 = vmatpush1.bf16.xpose.msra.mxu0 0
  %170 = vmatprep.subr.bf16.mxu0 0
  %171 = vmatpush1.bf16.xpose.msra.mxu0 0
  %172 = vmatprep.subr.bf16.mxu0 0
  %173 = vmatpush1.bf16.xpose.msra.mxu0 0
  %174 = vmatprep.subr.bf16.mxu0 0
  %175 = vmatpush1.bf16.xpose.msra.mxu0 0
  %176 = vmatprep.subr.bf16.mxu0 0
  %177 = vmatpush1.bf16.xpose.msra.mxu0 0
  %178 = vmatprep.subr.bf16.mxu0 0
  %179 = vmatpush1.bf16.xpose.msra.mxu0 0
  %180 = vmatprep.subr.bf16.mxu0 0
  %181 = vmatpush1.bf16.xpose.msra.mxu0 0
  %182 = vmatprep.subr.bf16.mxu0 0
  %183 = vmatpush1.bf16.xpose.msra.mxu0 0
  %184 = vmatprep.subr.bf16.mxu0 0
  %185 = vmatpush1.bf16.xpose.msra.mxu0 0
  %186 = vmatprep.subr.bf16.mxu0 0
  %187 = vmatpush1.bf16.xpose.msra.mxu0 0
  %188 = vmatprep.subr.bf16.mxu0 0
  %189 = vmatpush1.bf16.xpose.msra.mxu0 0
  %190 = vmatprep.subr.bf16.mxu0 0
  %191 = vmatpush1.bf16.xpose.msra.mxu0 0
  %192 = vmatprep.subr.bf16.mxu0 0
  %193 = vmatpush1.bf16.xpose.msra.mxu0 0
  %194 = vmatprep.subr.bf16.mxu0 0
  %195 = vmatpush1.bf16.xpose.msra.mxu0 0
  %196 = vmatprep.subr.bf16.mxu0 0
  %197 = vmatpush1.bf16.xpose.msra.mxu0 0
  %198 = vmatprep.mubr.bf16.mxu0 %v40
  %199 = vmatmul.mubr.bf16.gmra.mrb[0].mxu0 %v39
  %v200 = vpop.f32.mrb[0].mxu0
  %v201 = vadd.f32 %v80, %v200
  %v202 = vpop.f32.mrb[0].mxu0
  %v203 = vpop.f32.mrb[0].mxu0
  %v204 = vpop.f32.mrb[0].mxu0
  %205 = vdwg.mxu0
  %206 = vmatprep.subr.bf16.mxu0 %v121
  %207 = vmatpush1.bf16.xpose.msra.mxu0 %v120
  %208 = vmatprep.subr.bf16.mxu0 0
  %209 = vmatpush1.bf16.xpose.msra.mxu0 0
  %210 = vmatprep.subr.bf16.mxu0 0
  %211 = vmatpush1.bf16.xpose.msra.mxu0 0
  %212 = vmatprep.subr.bf16.mxu0 0
  %213 = vmatpush1.bf16.xpose.msra.mxu0 0
  %214 = vmatprep.subr.bf16.mxu0 0
  %215 = vmatpush1.bf16.xpose.msra.mxu0 0
  %216 = vmatprep.subr.bf16.mxu0 0
  %217 = vmatpush1.bf16.xpose.msra.mxu0 0
  %218 = vmatprep.subr.bf16.mxu0 0
  %219 = vmatpush1.bf16.xpose.msra.mxu0 0
  %220 = vmatprep.subr.bf16.mxu0 0
  %221 = vmatpush1.bf16.xpose.msra.mxu0 0
  %222 = vmatprep.subr.bf16.mxu0 0
  %223 = vmatpush1.bf16.xpose.msra.mxu0 0
  %224 = vmatprep.subr.bf16.mxu0 0
  %225 = vmatpush1.bf16.xpose.msra.mxu0 0
  %226 = vmatprep.subr.bf16.mxu0 0
  %227 = vmatpush1.bf16.xpose.msra.mxu0 0
  %228 = vmatprep.subr.bf16.mxu0 0
  %229 = vmatpush1.bf16.xpose.msra.mxu0 0
  %230 = vmatprep.subr.bf16.mxu0 0
  %231 = vmatpush1.bf16.xpose.msra.mxu0 0
  %232 = vmatprep.subr.bf16.mxu0 0
  %233 = vmatpush1.bf16.xpose.msra.mxu0 0
  %234 = vmatprep.subr.bf16.mxu0 0
  %235 = vmatpush1.bf16.xpose.msra.mxu0 0
  %236 = vmatprep.subr.bf16.mxu0 0
  %237 = vmatpush1.bf16.xpose.msra.mxu0 0
  %238 = vmatprep.mubr.bf16.mxu0 %v42
  %239 = vmatmul.mubr.bf16.gmra.mrb[0].mxu0 %v41
  %v240 = vpop.f32.mrb[0].mxu0
  %v241 = vadd.f32 %v201, %v240
  %v242 = vpop.f32.mrb[0].mxu0
  %v243 = vpop.f32.mrb[0].mxu0
  %v244 = vpop.f32.mrb[0].mxu0
  %245 = vdwg.mxu0
  %246 = vmatprep.subr.bf16.mxu0 %v123
  %247 = vmatpush1.bf16.xpose.msra.mxu0 %v122
  %248 = vmatprep.subr.bf16.mxu0 0
  %249 = vmatpush1.bf16.xpose.msra.mxu0 0
  %250 = vmatprep.subr.bf16.mxu0 0
  %251 = vmatpush1.bf16.xpose.msra.mxu0 0
  %252 = vmatprep.subr.bf16.mxu0 0
  %253 = vmatpush1.bf16.xpose.msra.mxu0 0
  %254 = vmatprep.subr.bf16.mxu0 0
  %255 = vmatpush1.bf16.xpose.msra.mxu0 0
  %256 = vmatprep.subr.bf16.mxu0 0
  %257 = vmatpush1.bf16.xpose.msra.mxu0 0
  %258 = vmatprep.subr.bf16.mxu0 0
  %259 = vmatpush1.bf16.xpose.msra.mxu0 0
  %260 = vmatprep.subr.bf16.mxu0 0
  %261 = vmatpush1.bf16.xpose.msra.mxu0 0
  %262 = vmatprep.subr.bf16.mxu0 0
  %263 = vmatpush1.bf16.xpose.msra.mxu0 0
  %264 = vmatprep.subr.bf16.mxu0 0
  %265 = vmatpush1.bf16.xpose.msra.mxu0 0
  %266 = vmatprep.subr.bf16.mxu0 0
  %267 = vmatpush1.bf16.xpose.msra.mxu0 0
  %268 = vmatprep.subr.bf16.mxu0 0
  %269 = vmatpush1.bf16.xpose.msra.mxu0 0
  %270 = vmatprep.subr.bf16.mxu0 0
  %271 = vmatpush1.bf16.xpose.msra.mxu0 0
  %272 = vmatprep.subr.bf16.mxu0 0
  %273 = vmatpush1.bf16.xpose.msra.mxu0 0
  %274 = vmatprep.subr.bf16.mxu0 0
  %275 = vmatpush1.bf16.xpose.msra.mxu0 0
  %276 = vmatprep.subr.bf16.mxu0 0
  %277 = vmatpush1.bf16.xpose.msra.mxu0 0
  %278 = vmatprep.mubr.bf16.mxu0 %v44
  %279 = vmatmul.mubr.bf16.gmra.mrb[0].mxu0 %v43
  %v280 = vpop.f32.mrb[0].mxu0
  %v281 = vadd.f32 %v241, %v280
  %v282 = vpop.f32.mrb[0].mxu0
  %v283 = vpop.f32.mrb[0].mxu0
  %v284 = vpop.f32.mrb[0].mxu0
  %285 = vdwg.mxu0
  %286 = vmatprep.subr.bf16.mxu0 %v125
  %287 = vmatpush1.bf16.xpose.msra.mxu0 %v124
  %288 = vmatprep.subr.bf16.mxu0 0
  %289 = vmatpush1.bf16.xpose.msra.mxu0 0
  %290 = vmatprep.subr.bf16.mxu0 0
  %291 = vmatpush1.bf16.xpose.msra.mxu0 0
  %292 = vmatprep.subr.bf16.mxu0 0
  %293 = vmatpush1.bf16.xpose.msra.mxu0 0
  %294 = vmatprep.subr.bf16.mxu0 0
  %295 = vmatpush1.bf16.xpose.msra.mxu0 0
  %296 = vmatprep.subr.bf16.mxu0 0
  %297 = vmatpush1.bf16.xpose.msra.mxu0 0
  %298 = vmatprep.subr.bf16.mxu0 0
  %299 = vmatpush1.bf16.xpose.msra.mxu0 0
  %300 = vmatprep.subr.bf16.mxu0 0
  %301 = vmatpush1.bf16.xpose.msra.mxu0 0
  %302 = vmatprep.subr.bf16.mxu0 0
  %303 = vmatpush1.bf16.xpose.msra.mxu0 0
  %304 = vmatprep.subr.bf16.mxu0 0
  %305 = vmatpush1.bf16.xpose.msra.mxu0 0
  %306 = vmatprep.subr.bf16.mxu0 0
  %307 = vmatpush1.bf16.xpose.msra.mxu0 0
  %308 = vmatprep.subr.bf16.mxu0 0
  %309 = vmatpush1.bf16.xpose.msra.mxu0 0
  %310 = vmatprep.subr.bf16.mxu0 0
  %311 = vmatpush1.bf16.xpose.msra.mxu0 0
  %312 = vmatprep.subr.bf16.mxu0 0
  %313 = vmatpush1.bf16.xpose.msra.mxu0 0
  %314 = vmatprep.subr.bf16.mxu0 0
  %315 = vmatpush1.bf16.xpose.msra.mxu0 0
  %316 = vmatprep.subr.bf16.mxu0 0
  %317 = vmatpush1.bf16.xpose.msra.mxu0 0
  %318 = vmatprep.mubr.bf16.mxu0 %v46
  %319 = vmatmul.mubr.bf16.gmra.mrb[0].mxu0 %v45
  %v320 = vpop.f32.mrb[0].mxu0
  %v321 = vadd.f32 %v281, %v320
  %v322 = vpop.f32.mrb[0].mxu0
  %v323 = vpop.f32.mrb[0].mxu0
  %v324 = vpop.f32.mrb[0].mxu0
  %325 = vdwg.mxu0
  %326 = vmatprep.subr.bf16.mxu0 %v127
  %327 = vmatpush1.bf16.xpose.msra.mxu0 %v126
  %328 = vmatprep.subr.bf16.mxu0 0
  %329 = vmatpush1.bf16.xpose.msra.mxu0 0
  %330 = vmatprep.subr.bf16.mxu0 0
  %331 = vmatpush1.bf16.xpose.msra.mxu0 0
  %332 = vmatprep.subr.bf16.mxu0 0
  %333 = vmatpush1.bf16.xpose.msra.mxu0 0
  %334 = vmatprep.subr.bf16.mxu0 0
  %335 = vmatpush1.bf16.xpose.msra.mxu0 0
  %336 = vmatprep.subr.bf16.mxu0 0
  %337 = vmatpush1.bf16.xpose.msra.mxu0 0
  %338 = vmatprep.subr.bf16.mxu0 0
  %339 = vmatpush1.bf16.xpose.msra.mxu0 0
  %340 = vmatprep.subr.bf16.mxu0 0
  %341 = vmatpush1.bf16.xpose.msra.mxu0 0
  %342 = vmatprep.subr.bf16.mxu0 0
  %343 = vmatpush1.bf16.xpose.msra.mxu0 0
  %344 = vmatprep.subr.bf16.mxu0 0
  %345 = vmatpush1.bf16.xpose.msra.mxu0 0
  %346 = vmatprep.subr.bf16.mxu0 0
  %347 = vmatpush1.bf16.xpose.msra.mxu0 0
  %348 = vmatprep.subr.bf16.mxu0 0
  %349 = vmatpush1.bf16.xpose.msra.mxu0 0
  %350 = vmatprep.subr.bf16.mxu0 0
  %351 = vmatpush1.bf16.xpose.msra.mxu0 0
  %352 = vmatprep.subr.bf16.mxu0 0
  %353 = vmatpush1.bf16.xpose.msra.mxu0 0
  %354 = vmatprep.subr.bf16.mxu0 0
  %355 = vmatpush1.bf16.xpose.msra.mxu0 0
  %356 = vmatprep.subr.bf16.mxu0 0
  %357 = vmatpush1.bf16.xpose.msra.mxu0 0
  %358 = vmatprep.mubr.bf16.mxu0 %v48
  %359 = vmatmul.mubr.bf16.gmra.mrb[0].mxu0 %v47
  %v360 = vpop.f32.mrb[0].mxu0
  %v361 = vadd.f32 %v321, %v360
  %v362 = vpop.f32.mrb[0].mxu0
  %v363 = vpop.f32.mrb[0].mxu0
  %v364 = vpop.f32.mrb[0].mxu0
  %365 = vdwg.mxu0
  %366 = vmatprep.subr.bf16.mxu0 %v129
  %367 = vmatpush1.bf16.xpose.msra.mxu0 %v128
  %368 = vmatprep.subr.bf16.mxu0 0
  %369 = vmatpush1.bf16.xpose.msra.mxu0 0
  %370 = vmatprep.subr.bf16.mxu0 0
  %371 = vmatpush1.bf16.xpose.msra.mxu0 0
  %372 = vmatprep.subr.bf16.mxu0 0
  %373 = vmatpush1.bf16.xpose.msra.mxu0 0
  %374 = vmatprep.subr.bf16.mxu0 0
  %375 = vmatpush1.bf16.xpose.msra.mxu0 0
  %376 = vmatprep.subr.bf16.mxu0 0
  %377 = vmatpush1.bf16.xpose.msra.mxu0 0
  %378 = vmatprep.subr.bf16.mxu0 0
  %379 = vmatpush1.bf16.xpose.msra.mxu0 0
  %380 = vmatprep.subr.bf16.mxu0 0
  %381 = vmatpush1.bf16.xpose.msra.mxu0 0
  %382 = vmatprep.subr.bf16.mxu0 0
  %383 = vmatpush1.bf16.xpose.msra.mxu0 0
  %384 = vmatprep.subr.bf16.mxu0 0
  %385 = vmatpush1.bf16.xpose.msra.mxu0 0
  %386 = vmatprep.subr.bf16.mxu0 0
  %387 = vmatpush1.bf16.xpose.msra.mxu0 0
  %388 = vmatprep.subr.bf16.mxu0 0
  %389 = vmatpush1.bf16.xpose.msra.mxu0 0
  %390 = vmatprep.subr.bf16.mxu0 0
  %391 = vmatpush1.bf16.xpose.msra.mxu0 0
  %392 = vmatprep.subr.bf16.mxu0 0
  %393 = vmatpush1.bf16.xpose.msra.mxu0 0
  %394 = vmatprep.subr.bf16.mxu0 0
  %395 = vmatpush1.bf16.xpose.msra.mxu0 0
  %396 = vmatprep.subr.bf16.mxu0 0
  %397 = vmatpush1.bf16.xpose.msra.mxu0 0
  %398 = vmatprep.mubr.bf16.mxu0 %v50
  %399 = vmatmul.mubr.bf16.gmra.mrb[0].mxu0 %v49
  %v400 = vpop.f32.mrb[0].mxu0
  %v401 = vadd.f32 %v361, %v400
  %v402 = vpop.f32.mrb[0].mxu0
  %v403 = vpop.f32.mrb[0].mxu0
  %v404 = vpop.f32.mrb[0].mxu0
  %405 = vdwg.mxu0
  %406 = vmatprep.subr.bf16.mxu0 %v131
  %407 = vmatpush1.bf16.xpose.msra.mxu0 %v130
  %408 = vmatprep.subr.bf16.mxu0 0
  %409 = vmatpush1.bf16.xpose.msra.mxu0 0
  %410 = vmatprep.subr.bf16.mxu0 0
  %411 = vmatpush1.bf16.xpose.msra.mxu0 0
  %412 = vmatprep.subr.bf16.mxu0 0
  %413 = vmatpush1.bf16.xpose.msra.mxu0 0
  %414 = vmatprep.subr.bf16.mxu0 0
  %415 = vmatpush1.bf16.xpose.msra.mxu0 0
  %416 = vmatprep.subr.bf16.mxu0 0
  %417 = vmatpush1.bf16.xpose.msra.mxu0 0
  %418 = vmatprep.subr.bf16.mxu0 0
  %419 = vmatpush1.bf16.xpose.msra.mxu0 0
  %420 = vmatprep.subr.bf16.mxu0 0
  %421 = vmatpush1.bf16.xpose.msra.mxu0 0
  %422 = vmatprep.subr.bf16.mxu0 0
  %423 = vmatpush1.bf16.xpose.msra.mxu0 0
  %424 = vmatprep.subr.bf16.mxu0 0
  %425 = vmatpush1.bf16.xpose.msra.mxu0 0
  %426 = vmatprep.subr.bf16.mxu0 0
  %427 = vmatpush1.bf16.xpose.msra.mxu0 0
  %428 = vmatprep.subr.bf16.mxu0 0
  %429 = vmatpush1.bf16.xpose.msra.mxu0 0
  %430 = vmatprep.subr.bf16.mxu0 0
  %431 = vmatpush1.bf16.xpose.msra.mxu0 0
  %432 = vmatprep.subr.bf16.mxu0 0
  %433 = vmatpush1.bf16.xpose.msra.mxu0 0
  %434 = vmatprep.subr.bf16.mxu0 0
  %435 = vmatpush1.bf16.xpose.msra.mxu0 0
  %436 = vmatprep.subr.bf16.mxu0 0
  %437 = vmatpush1.bf16.xpose.msra.mxu0 0
  %438 = vmatprep.mubr.bf16.mxu0 %v52
  %439 = vmatmul.mubr.bf16.gmra.mrb[0].mxu0 %v51
  %v440 = vpop.f32.mrb[0].mxu0
  %v441 = vadd.f32 %v401, %v440
  %v442 = vpop.f32.mrb[0].mxu0
  %v443 = vpop.f32.mrb[0].mxu0
  %v444 = vpop.f32.mrb[0].mxu0
  %445 = vdwg.mxu0
  %446 = vmatprep.subr.bf16.mxu0 %v133
  %447 = vmatpush1.bf16.xpose.msra.mxu0 %v132
  %448 = vmatprep.subr.bf16.mxu0 0
  %449 = vmatpush1.bf16.xpose.msra.mxu0 0
  %450 = vmatprep.subr.bf16.mxu0 0
  %451 = vmatpush1.bf16.xpose.msra.mxu0 0
  %452 = vmatprep.subr.bf16.mxu0 0
  %453 = vmatpush1.bf16.xpose.msra.mxu0 0
  %454 = vmatprep.subr.bf16.mxu0 0
  %455 = vmatpush1.bf16.xpose.msra.mxu0 0
  %456 = vmatprep.subr.bf16.mxu0 0
  %457 = vmatpush1.bf16.xpose.msra.mxu0 0
  %458 = vmatprep.subr.bf16.mxu0 0
  %459 = vmatpush1.bf16.xpose.msra.mxu0 0
  %460 = vmatprep.subr.bf16.mxu0 0
  %461 = vmatpush1.bf16.xpose.msra.mxu0 0
  %462 = vmatprep.subr.bf16.mxu0 0
  %463 = vmatpush1.bf16.xpose.msra.mxu0 0
  %464 = vmatprep.subr.bf16.mxu0 0
  %465 = vmatpush1.bf16.xpose.msra.mxu0 0
  %466 = vmatprep.subr.bf16.mxu0 0
  %467 = vmatpush1.bf16.xpose.msra.mxu0 0
  %468 = vmatprep.subr.bf16.mxu0 0
  %469 = vmatpush1.bf16.xpose.msra.mxu0 0
  %470 = vmatprep.subr.bf16.mxu0 0
  %471 = vmatpush1.bf16.xpose.msra.mxu0 0
  %472 = vmatprep.subr.bf16.mxu0 0
  %473 = vmatpush1.bf16.xpose.msra.mxu0 0
  %474 = vmatprep.subr.bf16.mxu0 0
  %475 = vmatpush1.bf16.xpose.msra.mxu0 0
  %476 = vmatprep.subr.bf16.mxu0 0
  %477 = vmatpush1.bf16.xpose.msra.mxu0 0
  %478 = vmatprep.mubr.bf16.mxu0 %v54
  %479 = vmatmul.mubr.bf16.gmra.mrb[0].mxu0 %v53
  %v480 = vpop.f32.mrb[0].mxu0
  %v481 = vadd.f32 %v441, %v480
  %v482 = vpop.f32.mrb[0].mxu0
  %v483 = vpop.f32.mrb[0].mxu0
  %v484 = vpop.f32.mrb[0].mxu0
  %485 = vdwg.mxu0
  %486 = vmatprep.subr.bf16.mxu0 %v135
  %487 = vmatpush1.bf16.xpose.msra.mxu0 %v134
  %488 = vmatprep.subr.bf16.mxu0 0
  %489 = vmatpush1.bf16.xpose.msra.mxu0 0
  %490 = vmatprep.subr.bf16.mxu0 0
  %491 = vmatpush1.bf16.xpose.msra.mxu0 0
  %492 = vmatprep.subr.bf16.mxu0 0
  %493 = vmatpush1.bf16.xpose.msra.mxu0 0
  %494 = vmatprep.subr.bf16.mxu0 0
  %495 = vmatpush1.bf16.xpose.msra.mxu0 0
  %496 = vmatprep.subr.bf16.mxu0 0
  %497 = vmatpush1.bf16.xpose.msra.mxu0 0
  %498 = vmatprep.subr.bf16.mxu0 0
  %499 = vmatpush1.bf16.xpose.msra.mxu0 0
  %500 = vmatprep.subr.bf16.mxu0 0
  %501 = vmatpush1.bf16.xpose.msra.mxu0 0
  %502 = vmatprep.subr.bf16.mxu0 0
  %503 = vmatpush1.bf16.xpose.msra.mxu0 0
  %504 = vmatprep.subr.bf16.mxu0 0
  %505 = vmatpush1.bf16.xpose.msra.mxu0 0
  %506 = vmatprep.subr.bf16.mxu0 0
  %507 = vmatpush1.bf16.xpose.msra.mxu0 0
  %508 = vmatprep.subr.bf16.mxu0 0
  %509 = vmatpush1.bf16.xpose.msra.mxu0 0
  %510 = vmatprep.subr.bf16.mxu0 0
  %511 = vmatpush1.bf16.xpose.msra.mxu0 0
  %512 = vmatprep.subr.bf16.mxu0 0
  %513 = vmatpush1.bf16.xpose.msra.mxu0 0
  %514 = vmatprep.subr.bf16.mxu0 0
  %515 = vmatpush1.bf16.xpose.msra.mxu0 0
  %516 = vmatprep.subr.bf16.mxu0 0
  %517 = vmatpush1.bf16.xpose.msra.mxu0 0
  %518 = vmatprep.mubr.bf16.mxu0 %v56
  %519 = vmatmul.mubr.bf16.gmra.mrb[0].mxu0 %v55
  %v520 = vpop.f32.mrb[0].mxu0
  %v521 = vadd.f32 %v481, %v520
  %v522 = vpop.f32.mrb[0].mxu0
  %v523 = vpop.f32.mrb[0].mxu0
  %v524 = vpop.f32.mrb[0].mxu0
  %525 = vdwg.mxu0
  %526 = vmatprep.subr.bf16.mxu0 %v137
  %527 = vmatpush1.bf16.xpose.msra.mxu0 %v136
  %528 = vmatprep.subr.bf16.mxu0 0
  %529 = vmatpush1.bf16.xpose.msra.mxu0 0
  %530 = vmatprep.subr.bf16.mxu0 0
  %531 = vmatpush1.bf16.xpose.msra.mxu0 0
  %532 = vmatprep.subr.bf16.mxu0 0
  %533 = vmatpush1.bf16.xpose.msra.mxu0 0
  %534 = vmatprep.subr.bf16.mxu0 0
  %535 = vmatpush1.bf16.xpose.msra.mxu0 0
  %536 = vmatprep.subr.bf16.mxu0 0
  %537 = vmatpush1.bf16.xpose.msra.mxu0 0
  %538 = vmatprep.subr.bf16.mxu0 0
  %539 = vmatpush1.bf16.xpose.msra.mxu0 0
  %540 = vmatprep.subr.bf16.mxu0 0
  %541 = vmatpush1.bf16.xpose.msra.mxu0 0
  %542 = vmatprep.subr.bf16.mxu0 0
  %543 = vmatpush1.bf16.xpose.msra.mxu0 0
  %544 = vmatprep.subr.bf16.mxu0 0
  %545 = vmatpush1.bf16.xpose.msra.mxu0 0
  %546 = vmatprep.subr.bf16.mxu0 0
  %547 = vmatpush1.bf16.xpose.msra.mxu0 0
  %548 = vmatprep.subr.bf16.mxu0 0
  %549 = vmatpush1.bf16.xpose.msra.mxu0 0
  %550 = vmatprep.subr.bf16.mxu0 0
  %551 = vmatpush1.bf16.xpose.msra.mxu0 0
  %552 = vmatprep.subr.bf16.mxu0 0
  %553 = vmatpush1.bf16.xpose.msra.mxu0 0
  %554 = vmatprep.subr.bf16.mxu0 0
  %555 = vmatpush1.bf16.xpose.msra.mxu0 0
  %556 = vmatprep.subr.bf16.mxu0 0
  %557 = vmatpush1.bf16.xpose.msra.mxu0 0
  %558 = vmatprep.mubr.bf16.mxu0 %v58
  %559 = vmatmul.mubr.bf16.gmra.mrb[0].mxu0 %v57
  %v560 = vpop.f32.mrb[0].mxu0
  %v561 = vadd.f32 %v521, %v560
  %v562 = vpop.f32.mrb[0].mxu0
  %v563 = vpop.f32.mrb[0].mxu0
  %v564 = vpop.f32.mrb[0].mxu0
  %565 = vdwg.mxu0
  %566 = vmatprep.subr.bf16.mxu0 %v139
  %567 = vmatpush1.bf16.xpose.msra.mxu0 %v138
  %568 = vmatprep.subr.bf16.mxu0 0
  %569 = vmatpush1.bf16.xpose.msra.mxu0 0
  %570 = vmatprep.subr.bf16.mxu0 0
  %571 = vmatpush1.bf16.xpose.msra.mxu0 0
  %572 = vmatprep.subr.bf16.mxu0 0
  %573 = vmatpush1.bf16.xpose.msra.mxu0 0
  %574 = vmatprep.subr.bf16.mxu0 0
  %575 = vmatpush1.bf16.xpose.msra.mxu0 0
  %576 = vmatprep.subr.bf16.mxu0 0
  %577 = vmatpush1.bf16.xpose.msra.mxu0 0
  %578 = vmatprep.subr.bf16.mxu0 0
  %579 = vmatpush1.bf16.xpose.msra.mxu0 0
  %580 = vmatprep.subr.bf16.mxu0 0
  %581 = vmatpush1.bf16.xpose.msra.mxu0 0
  %582 = vmatprep.subr.bf16.mxu0 0
  %583 = vmatpush1.bf16.xpose.msra.mxu0 0
  %584 = vmatprep.subr.bf16.mxu0 0
  %585 = vmatpush1.bf16.xpose.msra.mxu0 0
  %586 = vmatprep.subr.bf16.mxu0 0
  %587 = vmatpush1.bf16.xpose.msra.mxu0 0
  %588 = vmatprep.subr.bf16.mxu0 0
  %589 = vmatpush1.bf16.xpose.msra.mxu0 0
  %590 = vmatprep.subr.bf16.mxu0 0
  %591 = vmatpush1.bf16.xpose.msra.mxu0 0
  %592 = vmatprep.subr.bf16.mxu0 0
  %593 = vmatpush1.bf16.xpose.msra.mxu0 0
  %594 = vmatprep.subr.bf16.mxu0 0
  %595 = vmatpush1.bf16.xpose.msra.mxu0 0
  %596 = vmatprep.subr.bf16.mxu0 0
  %597 = vmatpush1.bf16.xpose.msra.mxu0 0
  %598 = vmatprep.mubr.bf16.mxu0 %v60
  %599 = vmatmul.mubr.bf16.gmra.mrb[0].mxu0 %v59
  %v600 = vpop.f32.mrb[0].mxu0
  %v601 = vadd.f32 %v561, %v600
  %v602 = vpop.f32.mrb[0].mxu0
  %v603 = vpop.f32.mrb[0].mxu0
  %v604 = vpop.f32.mrb[0].mxu0
  %605 = vdwg.mxu0
  %606 = vmatprep.subr.bf16.mxu0 %v141
  %607 = vmatpush1.bf16.xpose.msra.mxu0 %v140
  %608 = vmatprep.subr.bf16.mxu0 0
  %609 = vmatpush1.bf16.xpose.msra.mxu0 0
  %610 = vmatprep.subr.bf16.mxu0 0
  %611 = vmatpush1.bf16.xpose.msra.mxu0 0
  %612 = vmatprep.subr.bf16.mxu0 0
  %613 = vmatpush1.bf16.xpose.msra.mxu0 0
  %614 = vmatprep.subr.bf16.mxu0 0
  %615 = vmatpush1.bf16.xpose.msra.mxu0 0
  %616 = vmatprep.subr.bf16.mxu0 0
  %617 = vmatpush1.bf16.xpose.msra.mxu0 0
  %618 = vmatprep.subr.bf16.mxu0 0
  %619 = vmatpush1.bf16.xpose.msra.mxu0 0
  %620 = vmatprep.subr.bf16.mxu0 0
  %621 = vmatpush1.bf16.xpose.msra.mxu0 0
  %622 = vmatprep.subr.bf16.mxu0 0
  %623 = vmatpush1.bf16.xpose.msra.mxu0 0
  %624 = vmatprep.subr.bf16.mxu0 0
  %625 = vmatpush1.bf16.xpose.msra.mxu0 0
  %626 = vmatprep.subr.bf16.mxu0 0
  %627 = vmatpush1.bf16.xpose.msra.mxu0 0
  %628 = vmatprep.subr.bf16.mxu0 0
  %629 = vmatpush1.bf16.xpose.msra.mxu0 0
  %630 = vmatprep.subr.bf16.mxu0 0
  %631 = vmatpush1.bf16.xpose.msra.mxu0 0
  %632 = vmatprep.subr.bf16.mxu0 0
  %633 = vmatpush1.bf16.xpose.msra.mxu0 0
  %634 = vmatprep.subr.bf16.mxu0 0
  %635 = vmatpush1.bf16.xpose.msra.mxu0 0
  %636 = vmatprep.subr.bf16.mxu0 0
  %637 = vmatpush1.bf16.xpose.msra.mxu0 0
  %638 = vmatprep.mubr.bf16.mxu0 %v62
  %639 = vmatmul.mubr.bf16.gmra.mrb[0].mxu0 %v61
  %v640 = vpop.f32.mrb[0].mxu0
  %v641 = vadd.f32 %v601, %v640
  %v642 = vpop.f32.mrb[0].mxu0
  %v643 = vpop.f32.mrb[0].mxu0
  %v644 = vpop.f32.mrb[0].mxu0
  %645 = vdwg.mxu0
  %v646 = vtanh.pop %v641
  %vm647 = vcmask 64512
  %648 = vst.msk [vmem:[%s3] sm:$0xff] %vm647, %v646
  // Predicated region
  $region14: #{cifar10_encoder1_forward.1} parent=0 // pred_check
    _
  $region15: #{cifar10_encoder1_forward.1} parent=0 // pred_check_branch
    %650 = sbr.rel (0) target = $region17
  $region16: #{cifar10_encoder1_forward.1} parent=0 // pred_region
    _
  $region17: #{cifar10_encoder1_forward.1} parent=0 // pred_fallthru
    _
  // Predicated region
  $region18: #{cifar10_encoder1_forward.1} parent=0 // pred_check
    _
  $region19: #{cifar10_encoder1_forward.1} parent=0 // pred_check_branch
    %652 = sbr.rel (0) target = $region21
  $region20: #{cifar10_encoder1_forward.1} parent=0 // pred_region
    _
  $region21: #{cifar10_encoder1_forward.1} parent=0 // pred_fallthru
    _

</llo_original>
